<compile_context>
chip_gen: v7x
topology: tpu7x:2x2x1
jax: 0.10.0
libtpu: 0.0.40
codegen_flags: <defaults>
</compile_context>

<pallas_src>
import functools

import jax
import jax.numpy as jnp
from jax import lax
from jax.experimental import pallas as pl
from jax.experimental.pallas import tpu as pltpu

_LANES = 128
_EPS = 1e-5


def _res_dws_kernel(x_ref, par_ref, o_ref, *, H, W, K, BC, BCout):
    """One grid step = B batch elements, folded to (B*C, H*W).

    x_ref  : (BC, HW)       input tile; (batch, channel) folded on sublanes,
                            flattened spatial on lanes (lane-dense).
    par_ref: (R_pad, 128)   packed parameters:
                              rows [0, BC)        lanes [0, K*K): depthwise taps
                                                  (per-channel weights, tiled B times)
                              rows [BC, BC+BCout) lanes [0, BC) : block-diag 1x1 weights
    o_ref  : (BCout, HW)    output tile (residual added).
    """
    HW = H * W

    x = x_ref[...].astype(jnp.float32)             # (BC, HW)
    par = par_ref[...]                             # (R_pad, 128)

    # Reflect-pad boundary masks, computed once at (1, HW); jnp.where broadcasts.
    s = lax.broadcasted_iota(jnp.int32, (1, HW), 1)
    col = s % W
    col_lo = col == 0                              # col == 0
    col_hi = col == W - 1                          # col == W-1
    row_lo = s < W                                 # row == 0
    row_hi = s >= HW - W                           # row == H-1

    # ---- depthwise 3x3 conv with reflect padding: 8 XLU rolls total ----
    # roll(v, k)[s] == v[s - k]; opposite taps share one pair of rolls.
    x_m1 = pltpu.roll(x, shift=1, axis=1)          # x[s - 1]
    x_p1 = pltpu.roll(x, shift=HW - 1, axis=1)     # x[s + 1]
    cols = {
        -1: jnp.where(col_lo, x_p1, x_m1),         # col-1, reflected at col==0
        0: x,
        1: jnp.where(col_hi, x_m1, x_p1),          # col+1, reflected at col==W-1
    }

    acc = None
    for dx in (-1, 0, 1):
        v = cols[dx]
        v_dn = pltpu.roll(v, shift=W, axis=1)       # v[s - W]  (row above)
        v_up = pltpu.roll(v, shift=HW - W, axis=1)  # v[s + W]  (row below)
        rows = {
            -1: jnp.where(row_lo, v_up, v_dn),      # row-1, reflected at row==0
            0: v,
            1: jnp.where(row_hi, v_dn, v_up),       # row+1, reflected at row==H-1
        }
        for dy in (-1, 0, 1):
            t = (dy + 1) * K + (dx + 1)
            w_t = par[0:BC, t:t + 1]                # (BC, 1) tap weight
            contrib = rows[dy] * w_t
            acc = contrib if acc is None else acc + contrib
    # Depthwise bias dropped: a per-channel constant cancels under InstanceNorm.

    def inst_norm_relu(v):
        mean = jnp.mean(v, axis=-1, keepdims=True)
        c = v - mean
        var = jnp.mean(c * c, axis=-1, keepdims=True)
        return jnp.maximum(c * lax.rsqrt(var + _EPS), 0.0)

    h = inst_norm_relu(acc)                         # (BC, HW)

    # ---- pointwise 1x1 conv: BC broadcast FMAs against the block-diagonal
    # weight (VPU path; pointwise bias also cancels under InstanceNorm).
    # TODO(synk): switch to jnp.dot on the MXU once C grows past ~32-64.
    y = None
    for j in range(BC):
        wcol = par[BC:BC + BCout, j:j + 1]          # (BCout, 1)
        contrib = wcol * h[j:j + 1, :]              # (BCout, HW)
        y = contrib if y is None else y + contrib
    y = inst_norm_relu(y)                           # (BCout, HW)

    # ---- residual add (requires Cout == C) ----
    o_ref[...] = (x + y).astype(o_ref.dtype)


def _pick_batch_block(N, C, HW):
    """How many batch elements to fold into one grid step.

    Constraints: B divides N; B*C is sublane-tileable (multiple of 8, or the
    whole batch); ~12x the block footprint fits comfortably in scoped VMEM.
    Preference: largest B that still leaves >= 2 grid steps (v7x: 2 TCs via
    "parallel"); otherwise the largest valid B (whole batch at toy sizes).
    """
    vmem_budget = 24 * 1024 * 1024
    valid = []
    for B in range(1, N + 1):
        if N % B:
            continue
        if (B * C) % 8 and B != N:
            continue
        if 12 * B * C * HW * 4 > vmem_budget:
            continue
        valid.append(B)
    if not valid:
        return N                                    # TODO(synk): pad N for huge tiles
    multi_step = [B for B in valid if N // B >= 2]
    return max(multi_step) if multi_step else max(valid)


def residual_block_dws(x_nchw, w_dw, b_dw, w_pw, b_pw):
    """x_nchw: (N, C, H, W) float32.
       w_dw: (C, K, K)  depthwise weights (PyTorch (C,1,K,K) squeezed)
       b_dw: (C,)       depthwise bias (unused: cancels under InstanceNorm)
       w_pw: (Cout, C)  pointwise weights (PyTorch (Cout,C,1,1) squeezed)
       b_pw: (Cout,)    pointwise bias (unused: cancels under InstanceNorm)
       Returns (N, Cout, H, W), NCHW, with the residual added."""
    N, C, H, W = x_nchw.shape
    K = w_dw.shape[-1]
    Cout = w_pw.shape[0]
    assert Cout == C, "residual add requires input_channels == output_channels"
    assert K == 3, "kernel is specialized to the module's 3x3 depthwise conv"
    assert H >= 2 and W >= 2, "reflect pad=1 requires spatial dims >= 2"
    HW = H * W
    del b_dw, b_pw  # provably cancel under InstanceNorm (affine=False)

    B = _pick_batch_block(N, C, HW)
    BC, BCout = B * C, B * Cout
    assert BC <= _LANES, "packed block-diag pointwise weights need B*C <= 128"
    # TODO(synk): for B*C > 128, widen the param slab or pass w_pw separately.

    # Free contiguous reshape: (batch, channel) fold packs sublanes densely,
    # spatial lands on the lane axis.
    x_flat = x_nchw.reshape(N * C, HW)

    # Single lane-dense parameter slab: one unmasked DMA pair instead of four.
    w_dw_flat = w_dw.reshape(C, K * K).astype(jnp.float32)       # [c, ky*K+kx]
    w_dw_tiled = jnp.tile(w_dw_flat, (B, 1))                     # (BC, K*K)
    w_pw_bd = jnp.kron(jnp.eye(B, dtype=jnp.float32),
                       w_pw.astype(jnp.float32))                 # (BCout, BC)
    rows = BC + BCout
    rows_pad = -(-rows // 8) * 8
    params = jnp.zeros((rows_pad, _LANES), jnp.float32)
    params = params.at[0:BC, 0:K * K].set(w_dw_tiled)
    params = params.at[BC:BC + BCout, 0:BC].set(w_pw_bd)

    kernel = functools.partial(_res_dws_kernel, H=H, W=W, K=K, BC=BC, BCout=BCout)

    out_flat = pl.pallas_call(
        kernel,
        out_shape=jax.ShapeDtypeStruct((N * Cout, HW), x_nchw.dtype),
        grid_spec=pltpu.PrefetchScalarGridSpec(
            num_scalar_prefetch=0,
            grid=(N // B,),
            in_specs=[
                pl.BlockSpec((BC, HW), lambda n: (n, 0)),          # x (folded)
                pl.BlockSpec((rows_pad, _LANES), lambda n: (0, 0)),  # param slab
            ],
            out_specs=pl.BlockSpec((BCout, HW), lambda n: (n, 0)),
        ),
        compiler_params=pltpu.CompilerParams(
            dimension_semantics=("parallel",)),
        # TODO(synk): set vmem_limit_bytes once production tile sizes exceed the
        #             scoped default (budget against v7x's 64 MiB physical VMEM).
    )(x_flat, params)

    return out_flat.reshape(N, Cout, H, W)


def _reference(x, w_dw, b_dw, w_pw, b_pw, eps=1e-5):
    """Pure-JAX reference matching the PyTorch module (biases included)."""
    N, C, H, W = x.shape
    K = w_dw.shape[-1]
    xp = jnp.pad(x, ((0, 0), (0, 0), (1, 1), (1, 1)), mode="reflect")
    filt = jnp.transpose(w_dw, (1, 2, 0)).reshape(K, K, 1, C)       # HWIO, groups=C
    dw = lax.conv_general_dilated(
        xp, filt, window_strides=(1, 1), padding="VALID",
        dimension_numbers=("NCHW", "HWIO", "NCHW"), feature_group_count=C)
    dw = dw + b_dw[None, :, None, None]

    def inorm_relu(v):
        m = jnp.mean(v, axis=(2, 3), keepdims=True)
        var = jnp.mean((v - m) ** 2, axis=(2, 3), keepdims=True)
        return jnp.maximum((v - m) * lax.rsqrt(var + eps), 0.0)

    dw = inorm_relu(dw)
    pw = jnp.einsum("nchw,oc->nohw", dw, w_pw) + b_pw[None, :, None, None]
    pw = inorm_relu(pw)
    return x + pw


if __name__ == "__main__":
    key = jax.random.PRNGKey(0)
    k_x, k_wdw, k_bdw, k_wpw, k_bpw = jax.random.split(key, 5)

    N, C, H, W = 2, 4, 16, 16
    K = 3
    Cout = C  # residual add requires matching channel counts

    x = jax.random.normal(k_x, (N, C, H, W), dtype=jnp.float32)

    # Deterministic parameter init (uniform, roughly PyTorch fan-in bounds).
    bound_dw = 1.0 / (K * K) ** 0.5
    w_dw = jax.random.uniform(k_wdw, (C, K, K), jnp.float32, -bound_dw, bound_dw)
    b_dw = jax.random.uniform(k_bdw, (C,), jnp.float32, -bound_dw, bound_dw)
    bound_pw = 1.0 / C ** 0.5
    w_pw = jax.random.uniform(k_wpw, (Cout, C), jnp.float32, -bound_pw, bound_pw)
    b_pw = jax.random.uniform(k_bpw, (Cout,), jnp.float32, -bound_pw, bound_pw)

    out = residual_block_dws(x, w_dw, b_dw, w_pw, b_pw)
    out = jax.block_until_ready(out)

    ref = _reference(x, w_dw, b_dw, w_pw, b_pw)
    assert out.shape == (N, Cout, H, W), out.shape
    max_err = float(jnp.max(jnp.abs(out - ref)))
    assert jnp.allclose(out, ref, atol=1e-4, rtol=1e-4), max_err

    print("KERNEL_OK")
</pallas_src>

<mosaic_0001>
module attributes {stable_mosaic.version = 11 : i64} {
  func.func @_res_dws_kernel(%arg0: i32, %arg1: memref<8x256xf32, #tpu.memory_space<vmem>>, %arg2: memref<16x128xf32, #tpu.memory_space<vmem>>, %arg3: memref<8x256xf32, #tpu.memory_space<vmem>>) attributes {dimension_semantics = [#tpu.dimension_semantics<parallel>], iteration_bounds = array<i64: 1>, scalar_prefetch = 0 : i64, scratch_operands = 0 : i64, tpu.core_type = #tpu.core_type<tc>, window_params = [{transform_indices = @transform_0, window_bounds = array<i64: 8, 256>}, {pipeline_mode = #tpu.pipeline_mode<synchronous>, transform_indices = @transform_1, window_bounds = array<i64: 16, 128>}, {transform_indices = @transform_2, window_bounds = array<i64: 8, 256>}]} {
    %c0 = arith.constant 0 : index
    %c0_0 = arith.constant 0 : index
    %0 = vector.load %arg1[%c0, %c0_0] : memref<8x256xf32, #tpu.memory_space<vmem>>, vector<8x256xf32>
    %c0_1 = arith.constant 0 : index
    %c0_2 = arith.constant 0 : index
    %1 = vector.load %arg2[%c0_1, %c0_2] : memref<16x128xf32, #tpu.memory_space<vmem>>, vector<16x128xf32>
    %2 = tpu.iota {dimensions = array<i32: 1>} : vector<1x256xi32>
    %c16_i32 = arith.constant 16 : i32
    %c0_i32 = arith.constant 0 : i32
    %3 = arith.cmpi eq, %c16_i32, %c0_i32 : i32
    %c1_i32 = arith.constant 1 : i32
    %4 = arith.select %3, %c1_i32, %c16_i32 : i32
    %5 = vector.broadcast %4 : i32 to vector<1x256xi32>
    %6 = arith.remsi %2, %5 : vector<1x256xi32>
    %c0_i32_3 = arith.constant 0 : i32
    %7 = vector.broadcast %c0_i32_3 : i32 to vector<1x256xi32>
    %8 = arith.cmpi ne, %6, %7 : vector<1x256xi32>
    %c0_i32_4 = arith.constant 0 : i32
    %9 = vector.broadcast %c0_i32_4 : i32 to vector<1x256xi32>
    %10 = arith.cmpi slt, %6, %9 : vector<1x256xi32>
    %c0_i32_5 = arith.constant 0 : i32
    %11 = arith.cmpi slt, %4, %c0_i32_5 : i32
    %12 = vector.broadcast %11 : i1 to vector<1x256xi1>
    %13 = vector.broadcast %12 : vector<1x256xi1> to vector<1x256xi1>
    %14 = arith.xori %10, %13 : vector<1x256xi1>
    %15 = arith.andi %14, %8 : vector<1x256xi1>
    %16 = vector.broadcast %4 : i32 to vector<1x256xi32>
    %17 = arith.addi %6, %16 : vector<1x256xi32>
    %18 = arith.select %15, %17, %6 : vector<1x256xi1>, vector<1x256xi32>
    %c0_i32_6 = arith.constant 0 : i32
    %19 = vector.broadcast %c0_i32_6 : i32 to vector<1x256xi32>
    %20 = arith.cmpi eq, %18, %19 : vector<1x256xi32>
    %c15_i32 = arith.constant 15 : i32
    %21 = vector.broadcast %c15_i32 : i32 to vector<1x256xi32>
    %22 = arith.cmpi eq, %18, %21 : vector<1x256xi32>
    %c16_i32_7 = arith.constant 16 : i32
    %23 = vector.broadcast %c16_i32_7 : i32 to vector<1x256xi32>
    %24 = arith.cmpi slt, %2, %23 : vector<1x256xi32>
    %c240_i32 = arith.constant 240 : i32
    %25 = vector.broadcast %c240_i32 : i32 to vector<1x256xi32>
    %26 = arith.cmpi sge, %2, %25 : vector<1x256xi32>
    %c1_i32_8 = arith.constant 1 : i32
    %27 = tpu.dynamic_rotate %0 by %c1_i32_8 dim 1 : vector<8x256xf32>, i32 -> vector<8x256xf32>
    %c255_i32 = arith.constant 255 : i32
    %28 = tpu.dynamic_rotate %0 by %c255_i32 dim 1 : vector<8x256xf32>, i32 -> vector<8x256xf32>
    %29 = vector.shape_cast %20 : vector<1x256xi1> to vector<1x256xi1>
    %30 = vector.broadcast %29 : vector<1x256xi1> to vector<8x256xi1>
    %31 = arith.select %30, %28, %27 : vector<8x256xi1>, vector<8x256xf32>
    %32 = vector.shape_cast %22 : vector<1x256xi1> to vector<1x256xi1>
    %33 = vector.broadcast %32 : vector<1x256xi1> to vector<8x256xi1>
    %34 = arith.select %33, %27, %28 : vector<8x256xi1>, vector<8x256xf32>
    %c16_i32_9 = arith.constant 16 : i32
    %35 = tpu.dynamic_rotate %31 by %c16_i32_9 dim 1 : vector<8x256xf32>, i32 -> vector<8x256xf32>
    %c240_i32_10 = arith.constant 240 : i32
    %36 = tpu.dynamic_rotate %31 by %c240_i32_10 dim 1 : vector<8x256xf32>, i32 -> vector<8x256xf32>
    %37 = vector.shape_cast %24 : vector<1x256xi1> to vector<1x256xi1>
    %38 = vector.broadcast %37 : vector<1x256xi1> to vector<8x256xi1>
    %39 = arith.select %38, %36, %35 : vector<8x256xi1>, vector<8x256xf32>
    %40 = vector.shape_cast %26 : vector<1x256xi1> to vector<1x256xi1>
    %41 = vector.broadcast %40 : vector<1x256xi1> to vector<8x256xi1>
    %42 = arith.select %41, %35, %36 : vector<8x256xi1>, vector<8x256xf32>
    %43 = vector.extract_strided_slice %1 {offsets = [0, 0], sizes = [8, 1], strides = [1, 1]} : vector<16x128xf32> to vector<8x1xf32>
    %44 = vector.broadcast %43 : vector<8x1xf32> to vector<8x256xf32>
    %45 = arith.mulf %39, %44 : vector<8x256xf32>
    %46 = vector.extract_strided_slice %1 {offsets = [0, 3], sizes = [8, 1], strides = [1, 1]} : vector<16x128xf32> to vector<8x1xf32>
    %47 = vector.broadcast %46 : vector<8x1xf32> to vector<8x256xf32>
    %48 = arith.mulf %31, %47 : vector<8x256xf32>
    %49 = arith.addf %45, %48 : vector<8x256xf32>
    %50 = vector.extract_strided_slice %1 {offsets = [0, 6], sizes = [8, 1], strides = [1, 1]} : vector<16x128xf32> to vector<8x1xf32>
    %51 = vector.broadcast %50 : vector<8x1xf32> to vector<8x256xf32>
    %52 = arith.mulf %42, %51 : vector<8x256xf32>
    %53 = arith.addf %49, %52 : vector<8x256xf32>
    %c16_i32_11 = arith.constant 16 : i32
    %54 = tpu.dynamic_rotate %0 by %c16_i32_11 dim 1 : vector<8x256xf32>, i32 -> vector<8x256xf32>
    %c240_i32_12 = arith.constant 240 : i32
    %55 = tpu.dynamic_rotate %0 by %c240_i32_12 dim 1 : vector<8x256xf32>, i32 -> vector<8x256xf32>
    %56 = vector.shape_cast %24 : vector<1x256xi1> to vector<1x256xi1>
    %57 = vector.broadcast %56 : vector<1x256xi1> to vector<8x256xi1>
    %58 = arith.select %57, %55, %54 : vector<8x256xi1>, vector<8x256xf32>
    %59 = vector.shape_cast %26 : vector<1x256xi1> to vector<1x256xi1>
    %60 = vector.broadcast %59 : vector<1x256xi1> to vector<8x256xi1>
    %61 = arith.select %60, %54, %55 : vector<8x256xi1>, vector<8x256xf32>
    %62 = vector.extract_strided_slice %1 {offsets = [0, 1], sizes = [8, 1], strides = [1, 1]} : vector<16x128xf32> to vector<8x1xf32>
    %63 = vector.broadcast %62 : vector<8x1xf32> to vector<8x256xf32>
    %64 = arith.mulf %58, %63 : vector<8x256xf32>
    %65 = arith.addf %53, %64 : vector<8x256xf32>
    %66 = vector.extract_strided_slice %1 {offsets = [0, 4], sizes = [8, 1], strides = [1, 1]} : vector<16x128xf32> to vector<8x1xf32>
    %67 = vector.broadcast %66 : vector<8x1xf32> to vector<8x256xf32>
    %68 = arith.mulf %0, %67 : vector<8x256xf32>
    %69 = arith.addf %65, %68 : vector<8x256xf32>
    %70 = vector.extract_strided_slice %1 {offsets = [0, 7], sizes = [8, 1], strides = [1, 1]} : vector<16x128xf32> to vector<8x1xf32>
    %71 = vector.broadcast %70 : vector<8x1xf32> to vector<8x256xf32>
    %72 = arith.mulf %61, %71 : vector<8x256xf32>
    %73 = arith.addf %69, %72 : vector<8x256xf32>
    %c16_i32_13 = arith.constant 16 : i32
    %74 = tpu.dynamic_rotate %34 by %c16_i32_13 dim 1 : vector<8x256xf32>, i32 -> vector<8x256xf32>
    %c240_i32_14 = arith.constant 240 : i32
    %75 = tpu.dynamic_rotate %34 by %c240_i32_14 dim 1 : vector<8x256xf32>, i32 -> vector<8x256xf32>
    %76 = vector.shape_cast %24 : vector<1x256xi1> to vector<1x256xi1>
    %77 = vector.broadcast %76 : vector<1x256xi1> to vector<8x256xi1>
    %78 = arith.select %77, %75, %74 : vector<8x256xi1>, vector<8x256xf32>
    %79 = vector.shape_cast %26 : vector<1x256xi1> to vector<1x256xi1>
    %80 = vector.broadcast %79 : vector<1x256xi1> to vector<8x256xi1>
    %81 = arith.select %80, %74, %75 : vector<8x256xi1>, vector<8x256xf32>
    %82 = vector.extract_strided_slice %1 {offsets = [0, 2], sizes = [8, 1], strides = [1, 1]} : vector<16x128xf32> to vector<8x1xf32>
    %83 = vector.broadcast %82 : vector<8x1xf32> to vector<8x256xf32>
    %84 = arith.mulf %78, %83 : vector<8x256xf32>
    %85 = arith.addf %73, %84 : vector<8x256xf32>
    %86 = vector.extract_strided_slice %1 {offsets = [0, 5], sizes = [8, 1], strides = [1, 1]} : vector<16x128xf32> to vector<8x1xf32>
    %87 = vector.broadcast %86 : vector<8x1xf32> to vector<8x256xf32>
    %88 = arith.mulf %34, %87 : vector<8x256xf32>
    %89 = arith.addf %85, %88 : vector<8x256xf32>
    %90 = vector.extract_strided_slice %1 {offsets = [0, 8], sizes = [8, 1], strides = [1, 1]} : vector<16x128xf32> to vector<8x1xf32>
    %91 = vector.broadcast %90 : vector<8x1xf32> to vector<8x256xf32>
    %92 = arith.mulf %81, %91 : vector<8x256xf32>
    %93 = arith.addf %89, %92 : vector<8x256xf32>
    %cst = arith.constant dense<0.000000e+00> : vector<8xf32>
    %94 = vector.multi_reduction <add>, %93, %cst [1] : vector<8x256xf32> to vector<8xf32>
    %95 = vector.shape_cast %94 : vector<8xf32> to vector<8x1xf32>
    %cst_15 = arith.constant 2.560000e+02 : f32
    %96 = vector.broadcast %cst_15 : f32 to vector<8x1xf32>
    %97 = arith.divf %95, %96 : vector<8x1xf32>
    %98 = vector.broadcast %97 : vector<8x1xf32> to vector<8x256xf32>
    %99 = arith.subf %93, %98 : vector<8x256xf32>
    %100 = arith.mulf %99, %99 : vector<8x256xf32>
    %cst_16 = arith.constant dense<0.000000e+00> : vector<8xf32>
    %101 = vector.multi_reduction <add>, %100, %cst_16 [1] : vector<8x256xf32> to vector<8xf32>
    %102 = vector.shape_cast %101 : vector<8xf32> to vector<8x1xf32>
    %cst_17 = arith.constant 2.560000e+02 : f32
    %103 = vector.broadcast %cst_17 : f32 to vector<8x1xf32>
    %104 = arith.divf %102, %103 : vector<8x1xf32>
    %cst_18 = arith.constant 9.99999974E-6 : f32
    %105 = vector.broadcast %cst_18 : f32 to vector<8x1xf32>
    %106 = arith.addf %104, %105 : vector<8x1xf32>
    %107 = math.rsqrt %106 : vector<8x1xf32>
    %108 = vector.broadcast %107 : vector<8x1xf32> to vector<8x256xf32>
    %109 = arith.mulf %99, %108 : vector<8x256xf32>
    %cst_19 = arith.constant 0.000000e+00 : f32
    %110 = vector.broadcast %cst_19 : f32 to vector<8x256xf32>
    %111 = arith.maximumf %109, %110 : vector<8x256xf32>
    %112 = vector.extract_strided_slice %1 {offsets = [8, 0], sizes = [8, 1], strides = [1, 1]} : vector<16x128xf32> to vector<8x1xf32>
    %113 = vector.extract_strided_slice %111 {offsets = [0, 0], sizes = [1, 256], strides = [1, 1]} : vector<8x256xf32> to vector<1x256xf32>
    %114 = vector.broadcast %112 : vector<8x1xf32> to vector<8x256xf32>
    %115 = vector.broadcast %113 : vector<1x256xf32> to vector<8x256xf32>
    %116 = arith.mulf %114, %115 : vector<8x256xf32>
    %117 = vector.extract_strided_slice %1 {offsets = [8, 1], sizes = [8, 1], strides = [1, 1]} : vector<16x128xf32> to vector<8x1xf32>
    %118 = vector.extract_strided_slice %111 {offsets = [1, 0], sizes = [1, 256], strides = [1, 1]} : vector<8x256xf32> to vector<1x256xf32>
    %119 = vector.broadcast %117 : vector<8x1xf32> to vector<8x256xf32>
    %120 = vector.broadcast %118 : vector<1x256xf32> to vector<8x256xf32>
    %121 = arith.mulf %119, %120 : vector<8x256xf32>
    %122 = arith.addf %116, %121 : vector<8x256xf32>
    %123 = vector.extract_strided_slice %1 {offsets = [8, 2], sizes = [8, 1], strides = [1, 1]} : vector<16x128xf32> to vector<8x1xf32>
    %124 = vector.extract_strided_slice %111 {offsets = [2, 0], sizes = [1, 256], strides = [1, 1]} : vector<8x256xf32> to vector<1x256xf32>
    %125 = vector.broadcast %123 : vector<8x1xf32> to vector<8x256xf32>
    %126 = vector.broadcast %124 : vector<1x256xf32> to vector<8x256xf32>
    %127 = arith.mulf %125, %126 : vector<8x256xf32>
    %128 = arith.addf %122, %127 : vector<8x256xf32>
    %129 = vector.extract_strided_slice %1 {offsets = [8, 3], sizes = [8, 1], strides = [1, 1]} : vector<16x128xf32> to vector<8x1xf32>
    %130 = vector.extract_strided_slice %111 {offsets = [3, 0], sizes = [1, 256], strides = [1, 1]} : vector<8x256xf32> to vector<1x256xf32>
    %131 = vector.broadcast %129 : vector<8x1xf32> to vector<8x256xf32>
    %132 = vector.broadcast %130 : vector<1x256xf32> to vector<8x256xf32>
    %133 = arith.mulf %131, %132 : vector<8x256xf32>
    %134 = arith.addf %128, %133 : vector<8x256xf32>
    %135 = vector.extract_strided_slice %1 {offsets = [8, 4], sizes = [8, 1], strides = [1, 1]} : vector<16x128xf32> to vector<8x1xf32>
    %136 = vector.extract_strided_slice %111 {offsets = [4, 0], sizes = [1, 256], strides = [1, 1]} : vector<8x256xf32> to vector<1x256xf32>
    %137 = vector.broadcast %135 : vector<8x1xf32> to vector<8x256xf32>
    %138 = vector.broadcast %136 : vector<1x256xf32> to vector<8x256xf32>
    %139 = arith.mulf %137, %138 : vector<8x256xf32>
    %140 = arith.addf %134, %139 : vector<8x256xf32>
    %141 = vector.extract_strided_slice %1 {offsets = [8, 5], sizes = [8, 1], strides = [1, 1]} : vector<16x128xf32> to vector<8x1xf32>
    %142 = vector.extract_strided_slice %111 {offsets = [5, 0], sizes = [1, 256], strides = [1, 1]} : vector<8x256xf32> to vector<1x256xf32>
    %143 = vector.broadcast %141 : vector<8x1xf32> to vector<8x256xf32>
    %144 = vector.broadcast %142 : vector<1x256xf32> to vector<8x256xf32>
    %145 = arith.mulf %143, %144 : vector<8x256xf32>
    %146 = arith.addf %140, %145 : vector<8x256xf32>
    %147 = vector.extract_strided_slice %1 {offsets = [8, 6], sizes = [8, 1], strides = [1, 1]} : vector<16x128xf32> to vector<8x1xf32>
    %148 = vector.extract_strided_slice %111 {offsets = [6, 0], sizes = [1, 256], strides = [1, 1]} : vector<8x256xf32> to vector<1x256xf32>
    %149 = vector.broadcast %147 : vector<8x1xf32> to vector<8x256xf32>
    %150 = vector.broadcast %148 : vector<1x256xf32> to vector<8x256xf32>
    %151 = arith.mulf %149, %150 : vector<8x256xf32>
    %152 = arith.addf %146, %151 : vector<8x256xf32>
    %153 = vector.extract_strided_slice %1 {offsets = [8, 7], sizes = [8, 1], strides = [1, 1]} : vector<16x128xf32> to vector<8x1xf32>
    %154 = vector.extract_strided_slice %111 {offsets = [7, 0], sizes = [1, 256], strides = [1, 1]} : vector<8x256xf32> to vector<1x256xf32>
    %155 = vector.broadcast %153 : vector<8x1xf32> to vector<8x256xf32>
    %156 = vector.broadcast %154 : vector<1x256xf32> to vector<8x256xf32>
    %157 = arith.mulf %155, %156 : vector<8x256xf32>
    %158 = arith.addf %152, %157 : vector<8x256xf32>
    %cst_20 = arith.constant dense<0.000000e+00> : vector<8xf32>
    %159 = vector.multi_reduction <add>, %158, %cst_20 [1] : vector<8x256xf32> to vector<8xf32>
    %160 = vector.shape_cast %159 : vector<8xf32> to vector<8x1xf32>
    %cst_21 = arith.constant 2.560000e+02 : f32
    %161 = vector.broadcast %cst_21 : f32 to vector<8x1xf32>
    %162 = arith.divf %160, %161 : vector<8x1xf32>
    %163 = vector.broadcast %162 : vector<8x1xf32> to vector<8x256xf32>
    %164 = arith.subf %158, %163 : vector<8x256xf32>
    %165 = arith.mulf %164, %164 : vector<8x256xf32>
    %cst_22 = arith.constant dense<0.000000e+00> : vector<8xf32>
    %166 = vector.multi_reduction <add>, %165, %cst_22 [1] : vector<8x256xf32> to vector<8xf32>
    %167 = vector.shape_cast %166 : vector<8xf32> to vector<8x1xf32>
    %cst_23 = arith.constant 2.560000e+02 : f32
    %168 = vector.broadcast %cst_23 : f32 to vector<8x1xf32>
    %169 = arith.divf %167, %168 : vector<8x1xf32>
    %cst_24 = arith.constant 9.99999974E-6 : f32
    %170 = vector.broadcast %cst_24 : f32 to vector<8x1xf32>
    %171 = arith.addf %169, %170 : vector<8x1xf32>
    %172 = math.rsqrt %171 : vector<8x1xf32>
    %173 = vector.broadcast %172 : vector<8x1xf32> to vector<8x256xf32>
    %174 = arith.mulf %164, %173 : vector<8x256xf32>
    %cst_25 = arith.constant 0.000000e+00 : f32
    %175 = vector.broadcast %cst_25 : f32 to vector<8x256xf32>
    %176 = arith.maximumf %174, %175 : vector<8x256xf32>
    %177 = arith.addf %0, %176 : vector<8x256xf32>
    %c0_26 = arith.constant 0 : index
    %c0_27 = arith.constant 0 : index
    %178 = vector.load %arg3[%c0_26, %c0_27] : memref<8x256xf32, #tpu.memory_space<vmem>>, vector<8x256xf32>
    tpu.vector_store %arg3[%c0_26, %c0_27], %177 {strides = array<i32>} : memref<8x256xf32, #tpu.memory_space<vmem>>, vector<8x256xf32>,
    return
  }
  func.func @transform_0(%arg0: i32) -> (i32, i32) {
    %c0_i32 = arith.constant 0 : i32
    %c0_i32_0 = arith.constant 0 : i32
    return %arg0, %c0_i32 : i32, i32
  }
  func.func @transform_1(%arg0: i32) -> (i32, i32) {
    %c0_i32 = arith.constant 0 : i32
    %c0_i32_0 = arith.constant 0 : i32
    %c0_i32_1 = arith.constant 0 : i32
    return %c0_i32, %c0_i32_0 : i32, i32
  }
  func.func @transform_2(%arg0: i32) -> (i32, i32) {
    %c0_i32 = arith.constant 0 : i32
    %c0_i32_0 = arith.constant 0 : i32
    return %arg0, %c0_i32 : i32, i32
  }
}

</mosaic_0001>

<llo_original>
// kernel: tpu_custom_call.1
$region0: #{tpu_custom_call.1}
  #allocation0 [shape = 'u32[]', space=smem, size = 0x4, offset = 0x4, fixed_abs, tag = 'smem constant byte address 0x4 - core index']
  #allocation1 [shape = 'u32[144,128]{1,0:T(1,128)}', space=vmem, size = 0x12000, scoped, tag = 'internal scratch']
  %s0 = inlined_call_operand.hbm [shape: f32[8,256], index: 0, kind: input, shape index: {}]
  %s1 = inlined_call_operand.hbm [shape: f32[16,128], index: 1, kind: input, shape index: {}]
  %s2 = inlined_call_operand.hbm [shape: f32[8,256], index: 2, kind: output, shape index: {}]
  %s3 = sld [smem:[#allocation0]]
  $region26: #{tpu_custom_call.1} parent=0
    _
  %s5 = ssub.s32 1, %s3
  %s6 = scalar_select 0, %s5, %s3
  $region1: #{tpu_custom_call.1} parent=0
    #allocation2 [shape = 'u8[8192]{0}', space=vmem, size = 0x2000, scoped, tag = 'input window, operand 0, single buffered']
    #allocation3 [shape = 's32[1]{0}', space=sflag, size = 0x4, scoped, tag = 'scoped memory for tpu_custom_call.1']
    #allocation4 [shape = 's32[1]{0}', space=sflag, size = 0x4, scoped, tag = 'scoped memory for tpu_custom_call.1']
    #allocation5 [shape = 'u8[8192]{0}', space=vmem, size = 0x2000, scoped, tag = 'input window, operand 1, single buffered']
    #allocation6 [shape = 's32[1]{0}', space=sflag, size = 0x4, scoped, tag = 'scoped memory for tpu_custom_call.1']
    #allocation7 [shape = 'u8[8192]{0}', space=vmem, size = 0x2000, scoped, tag = 'output window, operand 0, single buffered']
    %7 = vsyncpa [#allocation3], 0
    %8 = vsyncpa [#allocation6], 0
    %9 = vsyncpa [#allocation4], 0
    // Predicated region
    $region2: #{tpu_custom_call.1} parent=1 // pred_check
      _
    $region3: #{tpu_custom_call.1} parent=1 // pred_check_branch
      %11 = sbr.rel (0) target = $region5
    $region4: #{tpu_custom_call.1} parent=1 // pred_region
      %s13 = ssub.s32 256, 256
      %14 = vsyncadd [#allocation3], %s13
      %s16 = sshll.u32 [#allocation2], 4
      %s17 = int_to_ptr.vmem [resolvable:$true] %s16
      %19 = dma.hbm_to_vmem [thread:$0]  %s0, 256, %s17, [#allocation3]
    $region5: #{tpu_custom_call.1} parent=1 // pred_fallthru
      _
    // Predicated region
    $region6: #{tpu_custom_call.1} parent=1 // pred_check
      _
    $region7: #{tpu_custom_call.1} parent=1 // pred_check_branch
      %21 = sbr.rel (0) target = $region9
    $region8: #{tpu_custom_call.1} parent=1 // pred_region
      %s23 = ssub.s32 256, 256
      %24 = vsyncadd [#allocation6], %s23
      %s25 = sshll.u32 [#allocation5], 4
      %s26 = int_to_ptr.vmem [resolvable:$true] %s25
      %31 = dma.hbm_to_vmem [thread:$0]  %s1, 256, %s26, [#allocation6], 128, 128, 8
    $region9: #{tpu_custom_call.1} parent=1 // pred_fallthru
      _
    // Predicated region
    $region10: #{tpu_custom_call.1} parent=1 // pred_check
      _
    $region11: #{tpu_custom_call.1} parent=1 // pred_check_branch
      %33 = sbr.rel (0) target = $region13
    $region12: #{tpu_custom_call.1} parent=1 // pred_region
      %34 = dma.done [#allocation3], 256
    $region13: #{tpu_custom_call.1} parent=1 // pred_fallthru
      _
    // Predicated region
    $region14: #{tpu_custom_call.1} parent=1 // pred_check
      _
    $region15: #{tpu_custom_call.1} parent=1 // pred_check_branch
      %36 = sbr.rel (0) target = $region17
    $region16: #{tpu_custom_call.1} parent=1 // pred_region
      %37 = dma.done [#allocation6], 256
    $region17: #{tpu_custom_call.1} parent=1 // pred_fallthru
      _
    %v38 = vld [vmem:[#allocation2] sm:$0xff]
    %v39 = vld [vmem:[#allocation2 + $0x8] sm:$0xff]
    %v40 = vld [vmem:[#allocation5] sm:$0xff]
    %v41 = vld [vmem:[#allocation5 + $0x8] sm:$0xff]
    %v42 = vlaneseq
    %v43 = vand.u32 %v42, 127
    %v44 = vadd.s32 %v43, 128
    %vm45 = vcmp.lt.s32.totalorder %v43, 0
    %v46 = vsub.s32 0, %v43
    %v47 = vsel %vm45, %v46, %v43
    %v48 = vshrl.u32 %v47, 4
    %v49 = vand.u32 %v47, 15
    %v50 = vsub.s32 0, %v49
    %v51 = vsel %vm45, %v50, %v49
    %vm52 = vcmp.lt.s32.totalorder %v44, 0
    %v53 = vsub.s32 0, %v44
    %v54 = vsel %vm52, %v53, %v44
    %v55 = vshrl.u32 %v54, 4
    %v56 = vand.u32 %v54, 15
    %v57 = vsub.s32 0, %v56
    %v58 = vsel %vm52, %v57, %v56
    %vm59 = vcmp.ne.s32.totalorder %v51, 0
    %vm60 = vcmp.ne.s32.totalorder %v58, 0
    %vm61 = vcmp.lt.s32.totalorder %v51, 0
    %vm62 = vcmp.lt.s32.totalorder %v58, 0
    %vm63 = vmand %vm61, %vm59
    %vm64 = vmand %vm62, %vm60
    %v65 = vadd.s32 %v51, 16
    %v66 = vadd.s32 %v58, 16
    %v67 = vsel %vm63, %v65, %v51
    %v68 = vsel %vm64, %v66, %v58
    %vm69 = vcmp.eq.s32.totalorder %v67, 0
    %vm70 = vcmp.eq.s32.totalorder %v68, 0
    %vm71 = vcmp.eq.s32.totalorder %v67, 15
    %vm72 = vcmp.eq.s32.totalorder %v68, 15
    %vm73 = vcmp.lt.s32.totalorder %v43, 16
    %vm74 = vcmp.lt.s32.totalorder %v44, 16
    %vm75 = vcmp.ge.s32.totalorder %v43, 240
    %vm76 = vcmp.ge.s32.totalorder %v44, 240
    %77 = vrot.lane.b32.xlu0 %v38, 1
    %v78 = vpop.permute.xlu0 %77
    %79 = vrot.lane.b32.xlu0 %v39, 1
    %v80 = vpop.permute.xlu0 %79
    %vm81 = vcmp.lt.s32.totalorder %v43, 1
    %v82 = vsel %vm81, %v78, %v80
    %v83 = vsel %vm81, %v80, %v78
    %84 = vrot.lane.b32.xlu0 %v38, 127
    %v85 = vpop.permute.xlu0 %84
    %86 = vrot.lane.b32.xlu0 %v39, 127
    %v87 = vpop.permute.xlu0 %86
    %vm88 = vcmp.lt.s32.totalorder %v43, 127
    %v89 = vsel %vm88, %v85, %v87
    %v90 = vsel %vm88, %v87, %v85
    %v91 = vsel %vm69, 1, 0
    %v92 = vsel %vm70, 1, 0
    %vm93 = vcmp.eq.s32.totalorder %v91, 1
    %vm94 = vcmp.eq.s32.totalorder %v92, 1
    %v95 = vsel %vm93, %v89, %v83
    %v96 = vsel %vm94, %v90, %v82
    %v97 = vsel %vm71, 1, 0
    %v98 = vsel %vm72, 1, 0
    %vm99 = vcmp.eq.s32.totalorder %v97, 1
    %vm100 = vcmp.eq.s32.totalorder %v98, 1
    %v101 = vsel %vm99, %v83, %v89
    %v102 = vsel %vm100, %v82, %v90
    %103 = vrot.lane.b32.xlu0 %v95, 16
    %v104 = vpop.permute.xlu0 %103
    %105 = vrot.lane.b32.xlu0 %v96, 16
    %v106 = vpop.permute.xlu0 %105
    %v107 = vsel %vm73, %v104, %v106
    %v108 = vsel %vm73, %v106, %v104
    %109 = vrot.lane.b32.xlu0 %v95, 112
    %v110 = vpop.permute.xlu0 %109
    %111 = vrot.lane.b32.xlu0 %v96, 112
    %v112 = vpop.permute.xlu0 %111
    %vm113 = vcmp.lt.s32.totalorder %v43, 112
    %v114 = vsel %vm113, %v110, %v112
    %v115 = vsel %vm113, %v112, %v110
    %v116 = vsel %vm73, 1, 0
    %v117 = vsel %vm74, 1, 0
    %vm118 = vcmp.eq.s32.totalorder %v116, 1
    %vm119 = vcmp.eq.s32.totalorder %v117, 1
    %v120 = vsel %vm118, %v114, %v108
    %v121 = vsel %vm119, %v115, %v107
    %v122 = vsel %vm75, 1, 0
    %v123 = vsel %vm76, 1, 0
    %vm124 = vcmp.eq.s32.totalorder %v122, 1
    %vm125 = vcmp.eq.s32.totalorder %v123, 1
    %v126 = vsel %vm124, %v108, %v114
    %v127 = vsel %vm125, %v107, %v115
    %129 = vset.pattern.permute.xlu0 0
    %130 = vperm.xlu0 %129, %v40
    %v131 = vpop.permute.xlu0 %130
    %v133 = vmul.f32 %v120, %v131
    %v134 = vmul.f32 %v121, %v131
    %135 = vset.pattern.permute.xlu0 3
    %136 = vperm.xlu0 %135, %v40
    %v137 = vpop.permute.xlu0 %136
    %v139 = vmul.f32 %v95, %v137
    %v140 = vmul.f32 %v96, %v137
    %v141 = vadd.f32 %v133, %v139
    %v142 = vadd.f32 %v134, %v140
    %143 = vset.pattern.permute.xlu0 6
    %144 = vperm.xlu0 %143, %v40
    %v145 = vpop.permute.xlu0 %144
    %v147 = vmul.f32 %v126, %v145
    %v148 = vmul.f32 %v127, %v145
    %v149 = vadd.f32 %v141, %v147
    %v150 = vadd.f32 %v142, %v148
    %151 = vrot.lane.b32.xlu0 %v38, 16
    %v152 = vpop.permute.xlu0 %151
    %153 = vrot.lane.b32.xlu0 %v39, 16
    %v154 = vpop.permute.xlu0 %153
    %v155 = vsel %vm73, %v152, %v154
    %v156 = vsel %vm73, %v154, %v152
    %157 = vrot.lane.b32.xlu0 %v38, 112
    %v158 = vpop.permute.xlu0 %157
    %159 = vrot.lane.b32.xlu0 %v39, 112
    %v160 = vpop.permute.xlu0 %159
    %v161 = vsel %vm113, %v158, %v160
    %v162 = vsel %vm113, %v160, %v158
    %v163 = vsel %vm118, %v161, %v156
    %v164 = vsel %vm119, %v162, %v155
    %v165 = vsel %vm124, %v156, %v161
    %v166 = vsel %vm125, %v155, %v162
    %167 = vset.pattern.permute.xlu0 1
    %168 = vperm.xlu0 %167, %v40
    %v169 = vpop.permute.xlu0 %168
    %v171 = vmul.f32 %v163, %v169
    %v172 = vmul.f32 %v164, %v169
    %v173 = vadd.f32 %v149, %v171
    %v174 = vadd.f32 %v150, %v172
    %175 = vset.pattern.permute.xlu0 4
    %176 = vperm.xlu0 %175, %v40
    %v177 = vpop.permute.xlu0 %176
    %v179 = vmul.f32 %v38, %v177
    %v180 = vmul.f32 %v39, %v177
    %v181 = vadd.f32 %v173, %v179
    %v182 = vadd.f32 %v174, %v180
    %183 = vset.pattern.permute.xlu0 7
    %184 = vperm.xlu0 %183, %v40
    %v185 = vpop.permute.xlu0 %184
    %v187 = vmul.f32 %v165, %v185
    %v188 = vmul.f32 %v166, %v185
    %v189 = vadd.f32 %v181, %v187
    %v190 = vadd.f32 %v182, %v188
    %191 = vrot.lane.b32.xlu0 %v101, 16
    %v192 = vpop.permute.xlu0 %191
    %193 = vrot.lane.b32.xlu0 %v102, 16
    %v194 = vpop.permute.xlu0 %193
    %v195 = vsel %vm73, %v192, %v194
    %v196 = vsel %vm73, %v194, %v192
    %197 = vrot.lane.b32.xlu0 %v101, 112
    %v198 = vpop.permute.xlu0 %197
    %199 = vrot.lane.b32.xlu0 %v102, 112
    %v200 = vpop.permute.xlu0 %199
    %v201 = vsel %vm113, %v198, %v200
    %v202 = vsel %vm113, %v200, %v198
    %v203 = vsel %vm118, %v201, %v196
    %v204 = vsel %vm119, %v202, %v195
    %v205 = vsel %vm124, %v196, %v201
    %v206 = vsel %vm125, %v195, %v202
    %207 = vset.pattern.permute.xlu0 2
    %208 = vperm.xlu0 %207, %v40
    %v209 = vpop.permute.xlu0 %208
    %v211 = vmul.f32 %v203, %v209
    %v212 = vmul.f32 %v204, %v209
    %v213 = vadd.f32 %v189, %v211
    %v214 = vadd.f32 %v190, %v212
    %215 = vset.pattern.permute.xlu0 5
    %216 = vperm.xlu0 %215, %v40
    %v217 = vpop.permute.xlu0 %216
    %v219 = vmul.f32 %v101, %v217
    %v220 = vmul.f32 %v102, %v217
    %v221 = vadd.f32 %v213, %v219
    %v222 = vadd.f32 %v214, %v220
    %223 = vset.pattern.permute.xlu0 8
    %224 = vperm.xlu0 %223, %v40
    %v225 = vpop.permute.xlu0 %224
    %v227 = vmul.f32 %v205, %v225
    %v228 = vmul.f32 %v206, %v225
    %v229 = vadd.f32 %v221, %v227
    %v230 = vadd.f32 %v222, %v228
    %v231 = vadd.f32 %v229, %v230
    %232 = vadd.xlane.f32.xlu0 %v231
    %v233 = vpop.xlane.xlu0 %232
    %v234 = vrcp.pop 256.0
    %v235 = vmul.f32 %v233, %v234
    %v236 = vsub.f32 %v229, %v235
    %v237 = vsub.f32 %v230, %v235
    %v238 = vmul.f32 %v236, %v236
    %v239 = vmul.f32 %v237, %v237
    %v240 = vadd.f32 %v238, %v239
    %241 = vadd.xlane.f32.xlu0 %v240
    %v242 = vpop.xlane.xlu0 %241
    %v243 = vmul.f32 %v242, %v234
    %v244 = vadd.f32 %v243, 1e-05
    %v245 = vrsqrt.pop %v244
    %v246 = vmul.f32 %v236, %v245
    %v247 = vmul.f32 %v237, %v245
    %v248 = vmax.f32 %v246, 0.0
    %v249 = vmax.f32 %v247, 0.0
    %251 = vset.pattern.permute.xlu0 0
    %252 = vperm.xlu0 %251, %v41
    %v253 = vpop.permute.xlu0 %252
    %v255 = vlaneseq
    %v256 = vshrl.u32 %v255, 7
    %v257 = vsub.s32 0, %v256
    %v258 = vrot.slane %v248, %v257
    %v259 = vlaneseq
    %v260 = vshrl.u32 %v259, 7
    %v261 = vsub.s32 0, %v260
    %v262 = vrot.slane %v249, %v261
    %v263 = vmul.f32 %v253, %v258
    %v264 = vmul.f32 %v253, %v262
    %265 = vset.pattern.permute.xlu0 1
    %266 = vperm.xlu0 %265, %v41
    %v267 = vpop.permute.xlu0 %266
    %v269 = vlaneseq
    %v270 = vshrl.u32 %v269, 7
    %v271 = vsub.s32 1, %v270
    %v272 = vrot.slane %v248, %v271
    %v273 = vlaneseq
    %v274 = vshrl.u32 %v273, 7
    %v275 = vsub.s32 1, %v274
    %v276 = vrot.slane %v249, %v275
    %v277 = vmul.f32 %v267, %v272
    %v278 = vmul.f32 %v267, %v276
    %v279 = vadd.f32 %v263, %v277
    %v280 = vadd.f32 %v264, %v278
    %281 = vset.pattern.permute.xlu0 2
    %282 = vperm.xlu0 %281, %v41
    %v283 = vpop.permute.xlu0 %282
    %v285 = vlaneseq
    %v286 = vshrl.u32 %v285, 7
    %v287 = vsub.s32 2, %v286
    %v288 = vrot.slane %v248, %v287
    %v289 = vlaneseq
    %v290 = vshrl.u32 %v289, 7
    %v291 = vsub.s32 2, %v290
    %v292 = vrot.slane %v249, %v291
    %v293 = vmul.f32 %v283, %v288
    %v294 = vmul.f32 %v283, %v292
    %v295 = vadd.f32 %v279, %v293
    %v296 = vadd.f32 %v280, %v294
    %297 = vset.pattern.permute.xlu0 3
    %298 = vperm.xlu0 %297, %v41
    %v299 = vpop.permute.xlu0 %298
    %v301 = vlaneseq
    %v302 = vshrl.u32 %v301, 7
    %v303 = vsub.s32 3, %v302
    %v304 = vrot.slane %v248, %v303
    %v305 = vlaneseq
    %v306 = vshrl.u32 %v305, 7
    %v307 = vsub.s32 3, %v306
    %v308 = vrot.slane %v249, %v307
    %v309 = vmul.f32 %v299, %v304
    %v310 = vmul.f32 %v299, %v308
    %v311 = vadd.f32 %v295, %v309
    %v312 = vadd.f32 %v296, %v310
    %313 = vset.pattern.permute.xlu0 4
    %314 = vperm.xlu0 %313, %v41
    %v315 = vpop.permute.xlu0 %314
    %v317 = vlaneseq
    %v318 = vshrl.u32 %v317, 7
    %v319 = vsub.s32 4, %v318
    %v320 = vrot.slane %v248, %v319
    %v321 = vlaneseq
    %v322 = vshrl.u32 %v321, 7
    %v323 = vsub.s32 4, %v322
    %v324 = vrot.slane %v249, %v323
    %v325 = vmul.f32 %v315, %v320
    %v326 = vmul.f32 %v315, %v324
    %v327 = vadd.f32 %v311, %v325
    %v328 = vadd.f32 %v312, %v326
    %329 = vset.pattern.permute.xlu0 5
    %330 = vperm.xlu0 %329, %v41
    %v331 = vpop.permute.xlu0 %330
    %v333 = vlaneseq
    %v334 = vshrl.u32 %v333, 7
    %v335 = vsub.s32 5, %v334
    %v336 = vrot.slane %v248, %v335
    %v337 = vlaneseq
    %v338 = vshrl.u32 %v337, 7
    %v339 = vsub.s32 5, %v338
    %v340 = vrot.slane %v249, %v339
    %v341 = vmul.f32 %v331, %v336
    %v342 = vmul.f32 %v331, %v340
    %v343 = vadd.f32 %v327, %v341
    %v344 = vadd.f32 %v328, %v342
    %345 = vset.pattern.permute.xlu0 6
    %346 = vperm.xlu0 %345, %v41
    %v347 = vpop.permute.xlu0 %346
    %v349 = vlaneseq
    %v350 = vshrl.u32 %v349, 7
    %v351 = vsub.s32 6, %v350
    %v352 = vrot.slane %v248, %v351
    %v353 = vlaneseq
    %v354 = vshrl.u32 %v353, 7
    %v355 = vsub.s32 6, %v354
    %v356 = vrot.slane %v249, %v355
    %v357 = vmul.f32 %v347, %v352
    %v358 = vmul.f32 %v347, %v356
    %v359 = vadd.f32 %v343, %v357
    %v360 = vadd.f32 %v344, %v358
    %361 = vset.pattern.permute.xlu0 7
    %362 = vperm.xlu0 %361, %v41
    %v363 = vpop.permute.xlu0 %362
    %v365 = vlaneseq
    %v366 = vshrl.u32 %v365, 7
    %v367 = vsub.s32 7, %v366
    %v368 = vrot.slane %v248, %v367
    %v369 = vlaneseq
    %v370 = vshrl.u32 %v369, 7
    %v371 = vsub.s32 7, %v370
    %v372 = vrot.slane %v249, %v371
    %v373 = vmul.f32 %v363, %v368
    %v374 = vmul.f32 %v363, %v372
    %v375 = vadd.f32 %v359, %v373
    %v376 = vadd.f32 %v360, %v374
    %v377 = vadd.f32 %v375, %v376
    %378 = vadd.xlane.f32.xlu0 %v377
    %v379 = vpop.xlane.xlu0 %378
    %v380 = vmul.f32 %v379, %v234
    %v381 = vsub.f32 %v375, %v380
    %v382 = vsub.f32 %v376, %v380
    %v383 = vmul.f32 %v381, %v381
    %v384 = vmul.f32 %v382, %v382
    %v385 = vadd.f32 %v383, %v384
    %386 = vadd.xlane.f32.xlu0 %v385
    %v387 = vpop.xlane.xlu0 %386
    %v388 = vmul.f32 %v387, %v234
    %v389 = vadd.f32 %v388, 1e-05
    %v390 = vrsqrt.pop %v389
    %v391 = vmul.f32 %v381, %v390
    %v392 = vmul.f32 %v382, %v390
    %v393 = vmax.f32 %v391, 0.0
    %v394 = vmax.f32 %v392, 0.0
    %v395 = vadd.f32 %v38, %v393
    %v396 = vadd.f32 %v39, %v394
    %397 = vst [vmem:[#allocation7] sm:$0xff] %v395
    %398 = vst [vmem:[#allocation7 + $0x8] sm:$0xff] %v396
    // Predicated region
    $region18: #{tpu_custom_call.1} parent=1 // pred_check
      _
    $region19: #{tpu_custom_call.1} parent=1 // pred_check_branch
      %400 = sbr.rel (0) target = $region21
    $region20: #{tpu_custom_call.1} parent=1 // pred_region
      %s402 = ssub.s32 256, 256
      %403 = vsyncadd [#allocation4], %s402
      %s405 = sshll.u32 [#allocation7], 4
      %s406 = int_to_ptr.vmem [resolvable:$true] %s405
      %408 = dma.vmem_to_hbm [thread:$0]  %s406, 256, %s2, [#allocation4]
    $region21: #{tpu_custom_call.1} parent=1 // pred_fallthru
      _
    // Predicated region
    $region22: #{tpu_custom_call.1} parent=1 // pred_check
      _
    $region23: #{tpu_custom_call.1} parent=1 // pred_check_branch
      %410 = sbr.rel (0) target = $region25
    $region24: #{tpu_custom_call.1} parent=1 // pred_region
      %411 = dma.done [#allocation4], 256
    $region25: #{tpu_custom_call.1} parent=1 // pred_fallthru
      _
    %412 = vsyncpa [#allocation3], 1
    %413 = vsyncpa [#allocation6], 1
    %414 = vsyncpa [#allocation4], 1

</llo_original>
